<compile_context>
chip_gen: v6e
topology: v6e:2x2x1
jax: 0.10.0
libtpu: 0.0.40
codegen_flags: <defaults>
</compile_context>

<pallas_src>
import functools

import jax
import jax.numpy as jnp
from jax.experimental import pallas as pl
from jax.experimental.pallas import tpu as pltpu

_BIG = 1e30  # sentinel: 2*_BIG is still finite in f32; exp(-_BIG) underflows to exactly 0


def _round_up(x: int, m: int) -> int:
    return ((x + m - 1) // m) * m


# --------------------------------------------------------------------------- #
# Rank-loss kernel: sum over the N x N pairwise matrix of softplus(-|t_i - t_j|)
# --------------------------------------------------------------------------- #
def _rank_bce_kernel(tcol_ref, trow_ref, bce_ref, *, t):
    i = pl.program_id(0)   # row block  ("parallel": splits across TCs on v7x)
    j = pl.program_id(1)   # col block  ("arbitrary": reduction axis, innermost)

    # The pairwise loss is symmetric, so only block pairs with j >= i are computed;
    # strictly-upper blocks are weighted 2x (they stand in for their mirror (j, i)).
    @pl.when(j >= i)
    def _():
        # Sentinel padding (+BIG in tcol tail, -BIG in trow tail) makes every pair
        # touching padding give |x| ~ 1e30 -> exp(-|x|) == 0 -> log1p == 0 exactly,
        # so no iota/compare/select mask is needed here.
        x = tcol_ref[...] - trow_ref[...]                  # (t,1) - (1,t) -> (t,t)
        loss = jnp.log1p(jnp.exp(-jnp.abs(x)))             # exact stable BCE, y = 1[x>0]

        # vreg-shaped (8,128) partial sum: tile-aligned slices + VPU vreg adds only
        # (one add per vreg of `loss`), no per-tile XLU reduce, no scalar broadcast.
        part = loss[0:8, :]
        for a in range(1, t // 8):
            part = part + loss[a * 8:(a + 1) * 8, :]       # (8, t)
        acc = part[:, 0:128]
        for e in range(1, t // 128):
            acc = acc + part[:, e * 128:(e + 1) * 128]     # (8, 128)
        acc = acc[None]                                    # (1, 8, 128)

        @pl.when(j == i)   # first visit of this row block: plain store doubles as init
        def _():
            bce_ref[...] = acc

        @pl.when(j > i)    # strictly-upper block counts for itself and its mirror
        def _():
            bce_ref[...] = bce_ref[...] + 2.0 * acc


# --------------------------------------------------------------------------- #
# Squared-error kernel for the RMSE term, decoupled from the rank kernel so the
# (rows, D) input blocks never occupy VMEM during the O(N^2) rank sweep.
# --------------------------------------------------------------------------- #
def _se_kernel(ro_ref, r_ref, se_ref):
    diff = ro_ref[...] - r_ref[...]
    se_ref[...] = jnp.broadcast_to(jnp.sum(diff * diff), se_ref.shape)


def full_pred_loss(ratio_out: jax.Array, ratio: jax.Array, alpha) -> jax.Array:
    """ratio_out, ratio: float32 arrays of shape (N, D); alpha: scalar. Returns scalar."""
    ratio_out = jnp.asarray(ratio_out, jnp.float32)
    ratio = jnp.asarray(ratio, jnp.float32)
    n, d = ratio.shape

    # ---------------- rank loss (dominant, EUP-bound pairwise term) -------- #
    # Square tiles (multiple of 128 for lane density).  Aim for >= 2 row blocks so the
    # "parallel" row axis can split across v7x's two TensorCores, cap at 512 so the few
    # (t,t) f32 elementwise temporaries (~1 MiB each) fit every generation's VMEM.
    t = max(128, min(512, _round_up(pl.cdiv(n, 2), 128)))
    gm = pl.cdiv(n, t)
    n_pad = gm * t

    total = ratio[:, -1]                                   # (n,) last column
    if n_pad == n:
        tcol = total.reshape(n, 1)
        trow = total.reshape(1, n)
    else:
        # Opposite-sign sentinels (NOT equal-sign: pad x pad pairs must not give log 2).
        tcol = jnp.full((n_pad, 1), _BIG, jnp.float32).at[:n, 0].set(total)
        trow = jnp.full((1, n_pad), -_BIG, jnp.float32).at[0, :n].set(total)

    bce_part = pl.pallas_call(
        functools.partial(_rank_bce_kernel, t=t),
        out_shape=jax.ShapeDtypeStruct((gm, 8, 128), jnp.float32),
        grid=(gm, gm),
        in_specs=[
            pl.BlockSpec((t, 1), lambda i, j: (i, 0)),     # total_ratio as a column
            pl.BlockSpec((1, t), lambda i, j: (0, j)),     # total_ratio as a row
        ],
        out_specs=pl.BlockSpec((1, 8, 128), lambda i, j: (i, 0, 0)),
        compiler_params=pltpu.CompilerParams(
            dimension_semantics=("parallel", "arbitrary"),
            vmem_limit_bytes=32 * 1024 * 1024),
    )(tcol, trow)
    # Tiny final cross-lane reduce + global normalization in plain JAX.
    rank_loss = jnp.sum(bce_part) / jnp.float32(n * n)

    # ---------------- RMSE term (mem-bound, row-tiled) ---------------------- #
    rb = min(512, _round_up(n, 8))
    g_se = pl.cdiv(n, rb)
    n_rows = g_se * rb
    if n_rows == n:                                        # pad only when actually needed
        ro_p, r_p = ratio_out, ratio
    else:                                                  # zero rows add exactly 0 to SE
        ro_p = jnp.zeros((n_rows, d), jnp.float32).at[:n].set(ratio_out)
        r_p = jnp.zeros((n_rows, d), jnp.float32).at[:n].set(ratio)

    se_part = pl.pallas_call(
        _se_kernel,
        out_shape=jax.ShapeDtypeStruct((g_se, 8, 128), jnp.float32),
        grid=(g_se,),
        in_specs=[
            pl.BlockSpec((rb, d), lambda i: (i, 0)),
            pl.BlockSpec((rb, d), lambda i: (i, 0)),
        ],
        out_specs=pl.BlockSpec((1, 8, 128), lambda i: (i, 0, 0)),
        compiler_params=pltpu.CompilerParams(
            dimension_semantics=("parallel",)),
    )(ro_p, r_p)
    pred_loss = jnp.sqrt(jnp.sum(se_part[:, 0, 0]) / jnp.float32(n * d))

    alpha = jnp.float32(alpha)
    return (1.0 - alpha) * pred_loss + alpha * rank_loss


def _full_predloss_ref(ratio_out, ratio, alpha):
    """Pure-JAX reference mirroring the PyTorch module literally."""
    pred_loss = jnp.sqrt(jnp.mean((ratio_out - ratio) ** 2))
    t = ratio[:, -1:]
    s = t - t.T
    y = jnp.where(s > 0, 1.0, 0.0)
    x = t - t.T                                            # pairwise_score (per spec)
    bce = jnp.maximum(x, 0.0) - x * y + jnp.log1p(jnp.exp(-jnp.abs(x)))
    rank_loss = jnp.mean(bce)
    return (1.0 - alpha) * pred_loss + alpha * rank_loss


if __name__ == "__main__":
    key = jax.random.PRNGKey(0)
    k1, k2 = jax.random.split(key)
    N, D = 8, 4                      # batch of 8 samples, 4 predicted ratios each
    ratio_out = jax.random.normal(k1, (N, D), dtype=jnp.float32)
    ratio = jax.random.normal(k2, (N, D), dtype=jnp.float32)
    alpha = 0.3

    out = full_pred_loss(ratio_out, ratio, alpha)
    out = jax.block_until_ready(out)

    ref = _full_predloss_ref(ratio_out, ratio, alpha)
    assert jnp.allclose(out, ref, rtol=1e-5, atol=1e-5), (out, ref)

    print("KERNEL_OK")
</pallas_src>

<mosaic_0001>
module attributes {stable_mosaic.version = 11 : i64} {
  func.func @_rank_bce_kernel(%arg0: i32, %arg1: i32, %arg2: memref<128x1xf32, #tpu.memory_space<vmem>>, %arg3: memref<1x128xf32, #tpu.memory_space<vmem>>, %arg4: memref<1x8x128xf32, #tpu.memory_space<vmem>>) attributes {dimension_semantics = [#tpu.dimension_semantics<parallel>, #tpu.dimension_semantics<arbitrary>], iteration_bounds = array<i64: 1, 1>, scalar_prefetch = 0 : i64, scratch_operands = 0 : i64, tpu.core_type = #tpu.core_type<tc>, window_params = [{transform_indices = @transform_0, window_bounds = array<i64: 128, 1>}, {transform_indices = @transform_1, window_bounds = array<i64: 1, 128>}, {transform_indices = @transform_2, window_bounds = array<i64: 1, 8, 128>}]} {
    %0 = arith.cmpi sge, %arg1, %arg0 : i32
    %1 = arith.extui %0 : i1 to i32
    %c0_i32 = arith.constant 0 : i32
    %2 = arith.cmpi ne, %1, %c0_i32 : i32
    scf.if %2 {
      %c0 = arith.constant 0 : index
      %c0_0 = arith.constant 0 : index
      %3 = vector.load %arg2[%c0, %c0_0] : memref<128x1xf32, #tpu.memory_space<vmem>>, vector<128x1xf32>
      %c0_1 = arith.constant 0 : index
      %c0_2 = arith.constant 0 : index
      %4 = vector.load %arg3[%c0_1, %c0_2] : memref<1x128xf32, #tpu.memory_space<vmem>>, vector<1x128xf32>
      %5 = vector.broadcast %3 : vector<128x1xf32> to vector<128x128xf32>
      %6 = vector.broadcast %4 : vector<1x128xf32> to vector<128x128xf32>
      %7 = arith.subf %5, %6 : vector<128x128xf32>
      %8 = math.absf %7 : vector<128x128xf32>
      %cst = arith.constant 0.000000e+00 : f32
      %9 = vector.broadcast %cst : f32 to vector<128x128xf32>
      %10 = arith.subf %9, %8 : vector<128x128xf32>
      %11 = math.exp %10 : vector<128x128xf32>
      %12 = math.log1p %11 : vector<128x128xf32>
      %13 = vector.extract_strided_slice %12 {offsets = [0, 0], sizes = [8, 128], strides = [1, 1]} : vector<128x128xf32> to vector<8x128xf32>
      %14 = vector.extract_strided_slice %12 {offsets = [8, 0], sizes = [8, 128], strides = [1, 1]} : vector<128x128xf32> to vector<8x128xf32>
      %15 = arith.addf %13, %14 : vector<8x128xf32>
      %16 = vector.extract_strided_slice %12 {offsets = [16, 0], sizes = [8, 128], strides = [1, 1]} : vector<128x128xf32> to vector<8x128xf32>
      %17 = arith.addf %15, %16 : vector<8x128xf32>
      %18 = vector.extract_strided_slice %12 {offsets = [24, 0], sizes = [8, 128], strides = [1, 1]} : vector<128x128xf32> to vector<8x128xf32>
      %19 = arith.addf %17, %18 : vector<8x128xf32>
      %20 = vector.extract_strided_slice %12 {offsets = [32, 0], sizes = [8, 128], strides = [1, 1]} : vector<128x128xf32> to vector<8x128xf32>
      %21 = arith.addf %19, %20 : vector<8x128xf32>
      %22 = vector.extract_strided_slice %12 {offsets = [40, 0], sizes = [8, 128], strides = [1, 1]} : vector<128x128xf32> to vector<8x128xf32>
      %23 = arith.addf %21, %22 : vector<8x128xf32>
      %24 = vector.extract_strided_slice %12 {offsets = [48, 0], sizes = [8, 128], strides = [1, 1]} : vector<128x128xf32> to vector<8x128xf32>
      %25 = arith.addf %23, %24 : vector<8x128xf32>
      %26 = vector.extract_strided_slice %12 {offsets = [56, 0], sizes = [8, 128], strides = [1, 1]} : vector<128x128xf32> to vector<8x128xf32>
      %27 = arith.addf %25, %26 : vector<8x128xf32>
      %28 = vector.extract_strided_slice %12 {offsets = [64, 0], sizes = [8, 128], strides = [1, 1]} : vector<128x128xf32> to vector<8x128xf32>
      %29 = arith.addf %27, %28 : vector<8x128xf32>
      %30 = vector.extract_strided_slice %12 {offsets = [72, 0], sizes = [8, 128], strides = [1, 1]} : vector<128x128xf32> to vector<8x128xf32>
      %31 = arith.addf %29, %30 : vector<8x128xf32>
      %32 = vector.extract_strided_slice %12 {offsets = [80, 0], sizes = [8, 128], strides = [1, 1]} : vector<128x128xf32> to vector<8x128xf32>
      %33 = arith.addf %31, %32 : vector<8x128xf32>
      %34 = vector.extract_strided_slice %12 {offsets = [88, 0], sizes = [8, 128], strides = [1, 1]} : vector<128x128xf32> to vector<8x128xf32>
      %35 = arith.addf %33, %34 : vector<8x128xf32>
      %36 = vector.extract_strided_slice %12 {offsets = [96, 0], sizes = [8, 128], strides = [1, 1]} : vector<128x128xf32> to vector<8x128xf32>
      %37 = arith.addf %35, %36 : vector<8x128xf32>
      %38 = vector.extract_strided_slice %12 {offsets = [104, 0], sizes = [8, 128], strides = [1, 1]} : vector<128x128xf32> to vector<8x128xf32>
      %39 = arith.addf %37, %38 : vector<8x128xf32>
      %40 = vector.extract_strided_slice %12 {offsets = [112, 0], sizes = [8, 128], strides = [1, 1]} : vector<128x128xf32> to vector<8x128xf32>
      %41 = arith.addf %39, %40 : vector<8x128xf32>
      %42 = vector.extract_strided_slice %12 {offsets = [120, 0], sizes = [8, 128], strides = [1, 1]} : vector<128x128xf32> to vector<8x128xf32>
      %43 = arith.addf %41, %42 : vector<8x128xf32>
      %44 = vector.shape_cast %43 : vector<8x128xf32> to vector<1x8x128xf32>
      %45 = arith.cmpi eq, %arg1, %arg0 : i32
      %46 = arith.extui %45 : i1 to i32
      %c0_i32_3 = arith.constant 0 : i32
      %47 = arith.cmpi ne, %46, %c0_i32_3 : i32
      scf.if %47 {
        %c0_5 = arith.constant 0 : index
        %c0_6 = arith.constant 0 : index
        %c0_7 = arith.constant 0 : index
        %51 = vector.load %arg4[%c0_5, %c0_6, %c0_7] : memref<1x8x128xf32, #tpu.memory_space<vmem>>, vector<1x8x128xf32>
        tpu.vector_store %arg4[%c0_5, %c0_6, %c0_7], %44 {strides = array<i32>} : memref<1x8x128xf32, #tpu.memory_space<vmem>>, vector<1x8x128xf32>,
      } else {
      }
      %48 = arith.cmpi sgt, %arg1, %arg0 : i32
      %49 = arith.extui %48 : i1 to i32
      %c0_i32_4 = arith.constant 0 : i32
      %50 = arith.cmpi ne, %49, %c0_i32_4 : i32
      scf.if %50 {
        %c0_5 = arith.constant 0 : index
        %c0_6 = arith.constant 0 : index
        %c0_7 = arith.constant 0 : index
        %51 = vector.load %arg4[%c0_5, %c0_6, %c0_7] : memref<1x8x128xf32, #tpu.memory_space<vmem>>, vector<1x8x128xf32>
        %cst_8 = arith.constant 2.000000e+00 : f32
        %52 = vector.broadcast %cst_8 : f32 to vector<1x8x128xf32>
        %53 = arith.mulf %52, %44 : vector<1x8x128xf32>
        %54 = arith.addf %51, %53 : vector<1x8x128xf32>
        %c0_9 = arith.constant 0 : index
        %c0_10 = arith.constant 0 : index
        %c0_11 = arith.constant 0 : index
        %55 = vector.load %arg4[%c0_9, %c0_10, %c0_11] : memref<1x8x128xf32, #tpu.memory_space<vmem>>, vector<1x8x128xf32>
        tpu.vector_store %arg4[%c0_9, %c0_10, %c0_11], %54 {strides = array<i32>} : memref<1x8x128xf32, #tpu.memory_space<vmem>>, vector<1x8x128xf32>,
      } else {
      }
    } else {
    }
    return
  }
  func.func @transform_0(%arg0: i32, %arg1: i32) -> (i32, i32) {
    %c0_i32 = arith.constant 0 : i32
    %c0_i32_0 = arith.constant 0 : i32
    return %arg0, %c0_i32 : i32, i32
  }
  func.func @transform_1(%arg0: i32, %arg1: i32) -> (i32, i32) {
    %c0_i32 = arith.constant 0 : i32
    %c0_i32_0 = arith.constant 0 : i32
    return %c0_i32, %arg1 : i32, i32
  }
  func.func @transform_2(%arg0: i32, %arg1: i32) -> (i32, i32, i32) {
    %c0_i32 = arith.constant 0 : i32
    %c0_i32_0 = arith.constant 0 : i32
    %c0_i32_1 = arith.constant 0 : i32
    return %arg0, %c0_i32, %c0_i32_0 : i32, i32, i32
  }
}

</mosaic_0001>

<llo_original>
// kernel: tpu_custom_call.1
$region0: #{tpu_custom_call.1}
  #allocation0 [shape = 'u32[]', space=smem, size = 0x4, offset = 0x4, fixed_abs, tag = 'smem constant byte address 0x4 - core index']
  #allocation1 [shape = 'u32[144,128]{1,0:T(1,128)}', space=vmem, size = 0x12000, scoped, tag = 'internal scratch']
  %s0 = inlined_call_operand.vmem [shape: f32[128,1], index: 0, kind: input, shape index: {}]
  %s1 = inlined_call_operand.vmem [shape: f32[1,128], index: 1, kind: input, shape index: {}]
  %s2 = inlined_call_operand.hbm [shape: f32[1,8,128], index: 2, kind: output, shape index: {}]
  %s3 = sld [smem:[#allocation0]]
  $region30: #{tpu_custom_call.1} parent=0
    _
  %s5 = ssub.s32 1, %s3
  %s6 = scalar_select 0, %s5, %s3
  $region1: #{tpu_custom_call.1} parent=0
    #allocation2 [shape = 'u8[4096]{0}', space=vmem, size = 0x1000, scoped, tag = 'output window, operand 0, single buffered']
    #allocation3 [shape = 's32[1]{0}', space=sflag, size = 0x4, scoped, tag = 'scoped memory for tpu_custom_call.1']
    %7 = vsyncpa [#allocation3], 0
    // Predicated region
    $region2: #{tpu_custom_call.1} parent=1 // pred_check
      _
    $region3: #{tpu_custom_call.1} parent=1 // pred_check_branch
      %9 = sbr.rel (0) target = $region5
    $region4: #{tpu_custom_call.1} parent=1 // pred_region
      _
    $region5: #{tpu_custom_call.1} parent=1 // pred_fallthru
      _
    // Predicated region
    $region6: #{tpu_custom_call.1} parent=1 // pred_check
      _
    $region7: #{tpu_custom_call.1} parent=1 // pred_check_branch
      %11 = sbr.rel (0) target = $region9
    $region8: #{tpu_custom_call.1} parent=1 // pred_region
      _
    $region9: #{tpu_custom_call.1} parent=1 // pred_fallthru
      _
    %p12 = scmp.ge.s32.totalorder 0, 0
    // Predicated region
    $region10: #{tpu_custom_call.1} parent=1 // pred_check
      %p13 = pneg %p12
    $region11: #{tpu_custom_call.1} parent=1 // pred_check_branch
      %15 = sbr.rel (%p13) target = $region13
    $region12: #{tpu_custom_call.1} parent=1 // pred_region
      %v16 = vld [vmem:[%s0] sm:$0xff]
      %v17 = vld [vmem:[%s0 + $0x8] sm:$0xff]
      %v18 = vld [vmem:[%s0 + $0x10] sm:$0xff]
      %v19 = vld [vmem:[%s0 + $0x18] sm:$0xff]
      %v20 = vld [vmem:[%s0 + $0x20] sm:$0xff]
      %v21 = vld [vmem:[%s0 + $0x28] sm:$0xff]
      %v22 = vld [vmem:[%s0 + $0x30] sm:$0xff]
      %v23 = vld [vmem:[%s0 + $0x38] sm:$0xff]
      %v24 = vld [vmem:[%s0 + $0x40] sm:$0xff]
      %v25 = vld [vmem:[%s0 + $0x48] sm:$0xff]
      %v26 = vld [vmem:[%s0 + $0x50] sm:$0xff]
      %v27 = vld [vmem:[%s0 + $0x58] sm:$0xff]
      %v28 = vld [vmem:[%s0 + $0x60] sm:$0xff]
      %v29 = vld [vmem:[%s0 + $0x68] sm:$0xff]
      %v30 = vld [vmem:[%s0 + $0x70] sm:$0xff]
      %v31 = vld [vmem:[%s0 + $0x78] sm:$0xff]
      %v32 = vld [vmem:[%s1] sm:$0x1]
      %34 = vset.pattern.permute.xlu0 0
      %35 = vperm.xlu0 %34, %v16
      %v36 = vpop.permute.xlu0 %35
      %39 = vset.pattern.permute.xlu0 0
      %40 = vperm.xlu0 %39, %v17
      %v41 = vpop.permute.xlu0 %40
      %44 = vset.pattern.permute.xlu0 0
      %45 = vperm.xlu0 %44, %v18
      %v46 = vpop.permute.xlu0 %45
      %49 = vset.pattern.permute.xlu0 0
      %50 = vperm.xlu0 %49, %v19
      %v51 = vpop.permute.xlu0 %50
      %54 = vset.pattern.permute.xlu0 0
      %55 = vperm.xlu0 %54, %v20
      %v56 = vpop.permute.xlu0 %55
      %59 = vset.pattern.permute.xlu0 0
      %60 = vperm.xlu0 %59, %v21
      %v61 = vpop.permute.xlu0 %60
      %64 = vset.pattern.permute.xlu0 0
      %65 = vperm.xlu0 %64, %v22
      %v66 = vpop.permute.xlu0 %65
      %69 = vset.pattern.permute.xlu0 0
      %70 = vperm.xlu0 %69, %v23
      %v71 = vpop.permute.xlu0 %70
      %74 = vset.pattern.permute.xlu0 0
      %75 = vperm.xlu0 %74, %v24
      %v76 = vpop.permute.xlu0 %75
      %79 = vset.pattern.permute.xlu0 0
      %80 = vperm.xlu0 %79, %v25
      %v81 = vpop.permute.xlu0 %80
      %84 = vset.pattern.permute.xlu0 0
      %85 = vperm.xlu0 %84, %v26
      %v86 = vpop.permute.xlu0 %85
      %89 = vset.pattern.permute.xlu0 0
      %90 = vperm.xlu0 %89, %v27
      %v91 = vpop.permute.xlu0 %90
      %94 = vset.pattern.permute.xlu0 0
      %95 = vperm.xlu0 %94, %v28
      %v96 = vpop.permute.xlu0 %95
      %99 = vset.pattern.permute.xlu0 0
      %100 = vperm.xlu0 %99, %v29
      %v101 = vpop.permute.xlu0 %100
      %104 = vset.pattern.permute.xlu0 0
      %105 = vperm.xlu0 %104, %v30
      %v106 = vpop.permute.xlu0 %105
      %109 = vset.pattern.permute.xlu0 0
      %110 = vperm.xlu0 %109, %v31
      %v111 = vpop.permute.xlu0 %110
      %v114 = vlaneseq
      %v115 = vshrl.u32 %v114, 7
      %v116 = vsub.s32 0, %v115
      %v117 = vrot.slane %v32, %v116
      %v119 = vsub.f32 %v36, %v117
      %v120 = vsub.f32 %v41, %v117
      %v121 = vsub.f32 %v46, %v117
      %v122 = vsub.f32 %v51, %v117
      %v123 = vsub.f32 %v56, %v117
      %v124 = vsub.f32 %v61, %v117
      %v125 = vsub.f32 %v66, %v117
      %v126 = vsub.f32 %v71, %v117
      %v127 = vsub.f32 %v76, %v117
      %v128 = vsub.f32 %v81, %v117
      %v129 = vsub.f32 %v86, %v117
      %v130 = vsub.f32 %v91, %v117
      %v131 = vsub.f32 %v96, %v117
      %v132 = vsub.f32 %v101, %v117
      %v133 = vsub.f32 %v106, %v117
      %v134 = vsub.f32 %v111, %v117
      %v135 = vand.u32 2147483647, %v119
      %v136 = vand.u32 2147483647, %v120
      %v137 = vand.u32 2147483647, %v121
      %v138 = vand.u32 2147483647, %v122
      %v139 = vand.u32 2147483647, %v123
      %v140 = vand.u32 2147483647, %v124
      %v141 = vand.u32 2147483647, %v125
      %v142 = vand.u32 2147483647, %v126
      %v143 = vand.u32 2147483647, %v127
      %v144 = vand.u32 2147483647, %v128
      %v145 = vand.u32 2147483647, %v129
      %v146 = vand.u32 2147483647, %v130
      %v147 = vand.u32 2147483647, %v131
      %v148 = vand.u32 2147483647, %v132
      %v149 = vand.u32 2147483647, %v133
      %v150 = vand.u32 2147483647, %v134
      %v151 = vsub.f32 0.0, %v135
      %v152 = vsub.f32 0.0, %v136
      %v153 = vsub.f32 0.0, %v137
      %v154 = vsub.f32 0.0, %v138
      %v155 = vsub.f32 0.0, %v139
      %v156 = vsub.f32 0.0, %v140
      %v157 = vsub.f32 0.0, %v141
      %v158 = vsub.f32 0.0, %v142
      %v159 = vsub.f32 0.0, %v143
      %v160 = vsub.f32 0.0, %v144
      %v161 = vsub.f32 0.0, %v145
      %v162 = vsub.f32 0.0, %v146
      %v163 = vsub.f32 0.0, %v147
      %v164 = vsub.f32 0.0, %v148
      %v165 = vsub.f32 0.0, %v149
      %v166 = vsub.f32 0.0, %v150
      %v167 = vmul.f32 %v151, 1.442695
      %v168 = vpow.pop %v167
      %v169 = vmul.f32 %v152, 1.442695
      %v170 = vpow.pop %v169
      %v171 = vmul.f32 %v153, 1.442695
      %v172 = vpow.pop %v171
      %v173 = vmul.f32 %v154, 1.442695
      %v174 = vpow.pop %v173
      %v175 = vmul.f32 %v155, 1.442695
      %v176 = vpow.pop %v175
      %v177 = vmul.f32 %v156, 1.442695
      %v178 = vpow.pop %v177
      %v179 = vmul.f32 %v157, 1.442695
      %v180 = vpow.pop %v179
      %v181 = vmul.f32 %v158, 1.442695
      %v182 = vpow.pop %v181
      %v183 = vmul.f32 %v159, 1.442695
      %v184 = vpow.pop %v183
      %v185 = vmul.f32 %v160, 1.442695
      %v186 = vpow.pop %v185
      %v187 = vmul.f32 %v161, 1.442695
      %v188 = vpow.pop %v187
      %v189 = vmul.f32 %v162, 1.442695
      %v190 = vpow.pop %v189
      %v191 = vmul.f32 %v163, 1.442695
      %v192 = vpow.pop %v191
      %v193 = vmul.f32 %v164, 1.442695
      %v194 = vpow.pop %v193
      %v195 = vmul.f32 %v165, 1.442695
      %v196 = vpow.pop %v195
      %v197 = vmul.f32 %v166, 1.442695
      %v198 = vpow.pop %v197
      %v199 = vadd.f32 %v168, 1.0
      %v200 = vlog2.pop %v199
      %v201 = vmul.f32 %v200, 0.6931472
      %v202 = vmul.f32 -0.5, %v168
      %v203 = vadd.f32 %v202, 1.0
      %v204 = vmul.f32 %v203, %v168
      %v205 = vand.u32 2147483647, %v168
      %vm206 = vcmp.lt.f32.partialorder %v205, 0.0004427343
      %v207 = vsel %vm206, %v204, %v201
      %v208 = vadd.f32 %v170, 1.0
      %v209 = vlog2.pop %v208
      %v210 = vmul.f32 %v209, 0.6931472
      %v211 = vmul.f32 -0.5, %v170
      %v212 = vadd.f32 %v211, 1.0
      %v213 = vmul.f32 %v212, %v170
      %v214 = vand.u32 2147483647, %v170
      %vm215 = vcmp.lt.f32.partialorder %v214, 0.0004427343
      %v216 = vsel %vm215, %v213, %v210
      %v217 = vadd.f32 %v172, 1.0
      %v218 = vlog2.pop %v217
      %v219 = vmul.f32 %v218, 0.6931472
      %v220 = vmul.f32 -0.5, %v172
      %v221 = vadd.f32 %v220, 1.0
      %v222 = vmul.f32 %v221, %v172
      %v223 = vand.u32 2147483647, %v172
      %vm224 = vcmp.lt.f32.partialorder %v223, 0.0004427343
      %v225 = vsel %vm224, %v222, %v219
      %v226 = vadd.f32 %v174, 1.0
      %v227 = vlog2.pop %v226
      %v228 = vmul.f32 %v227, 0.6931472
      %v229 = vmul.f32 -0.5, %v174
      %v230 = vadd.f32 %v229, 1.0
      %v231 = vmul.f32 %v230, %v174
      %v232 = vand.u32 2147483647, %v174
      %vm233 = vcmp.lt.f32.partialorder %v232, 0.0004427343
      %v234 = vsel %vm233, %v231, %v228
      %v235 = vadd.f32 %v176, 1.0
      %v236 = vlog2.pop %v235
      %v237 = vmul.f32 %v236, 0.6931472
      %v238 = vmul.f32 -0.5, %v176
      %v239 = vadd.f32 %v238, 1.0
      %v240 = vmul.f32 %v239, %v176
      %v241 = vand.u32 2147483647, %v176
      %vm242 = vcmp.lt.f32.partialorder %v241, 0.0004427343
      %v243 = vsel %vm242, %v240, %v237
      %v244 = vadd.f32 %v178, 1.0
      %v245 = vlog2.pop %v244
      %v246 = vmul.f32 %v245, 0.6931472
      %v247 = vmul.f32 -0.5, %v178
      %v248 = vadd.f32 %v247, 1.0
      %v249 = vmul.f32 %v248, %v178
      %v250 = vand.u32 2147483647, %v178
      %vm251 = vcmp.lt.f32.partialorder %v250, 0.0004427343
      %v252 = vsel %vm251, %v249, %v246
      %v253 = vadd.f32 %v180, 1.0
      %v254 = vlog2.pop %v253
      %v255 = vmul.f32 %v254, 0.6931472
      %v256 = vmul.f32 -0.5, %v180
      %v257 = vadd.f32 %v256, 1.0
      %v258 = vmul.f32 %v257, %v180
      %v259 = vand.u32 2147483647, %v180
      %vm260 = vcmp.lt.f32.partialorder %v259, 0.0004427343
      %v261 = vsel %vm260, %v258, %v255
      %v262 = vadd.f32 %v182, 1.0
      %v263 = vlog2.pop %v262
      %v264 = vmul.f32 %v263, 0.6931472
      %v265 = vmul.f32 -0.5, %v182
      %v266 = vadd.f32 %v265, 1.0
      %v267 = vmul.f32 %v266, %v182
      %v268 = vand.u32 2147483647, %v182
      %vm269 = vcmp.lt.f32.partialorder %v268, 0.0004427343
      %v270 = vsel %vm269, %v267, %v264
      %v271 = vadd.f32 %v184, 1.0
      %v272 = vlog2.pop %v271
      %v273 = vmul.f32 %v272, 0.6931472
      %v274 = vmul.f32 -0.5, %v184
      %v275 = vadd.f32 %v274, 1.0
      %v276 = vmul.f32 %v275, %v184
      %v277 = vand.u32 2147483647, %v184
      %vm278 = vcmp.lt.f32.partialorder %v277, 0.0004427343
      %v279 = vsel %vm278, %v276, %v273
      %v280 = vadd.f32 %v186, 1.0
      %v281 = vlog2.pop %v280
      %v282 = vmul.f32 %v281, 0.6931472
      %v283 = vmul.f32 -0.5, %v186
      %v284 = vadd.f32 %v283, 1.0
      %v285 = vmul.f32 %v284, %v186
      %v286 = vand.u32 2147483647, %v186
      %vm287 = vcmp.lt.f32.partialorder %v286, 0.0004427343
      %v288 = vsel %vm287, %v285, %v282
      %v289 = vadd.f32 %v188, 1.0
      %v290 = vlog2.pop %v289
      %v291 = vmul.f32 %v290, 0.6931472
      %v292 = vmul.f32 -0.5, %v188
      %v293 = vadd.f32 %v292, 1.0
      %v294 = vmul.f32 %v293, %v188
      %v295 = vand.u32 2147483647, %v188
      %vm296 = vcmp.lt.f32.partialorder %v295, 0.0004427343
      %v297 = vsel %vm296, %v294, %v291
      %v298 = vadd.f32 %v190, 1.0
      %v299 = vlog2.pop %v298
      %v300 = vmul.f32 %v299, 0.6931472
      %v301 = vmul.f32 -0.5, %v190
      %v302 = vadd.f32 %v301, 1.0
      %v303 = vmul.f32 %v302, %v190
      %v304 = vand.u32 2147483647, %v190
      %vm305 = vcmp.lt.f32.partialorder %v304, 0.0004427343
      %v306 = vsel %vm305, %v303, %v300
      %v307 = vadd.f32 %v192, 1.0
      %v308 = vlog2.pop %v307
      %v309 = vmul.f32 %v308, 0.6931472
      %v310 = vmul.f32 -0.5, %v192
      %v311 = vadd.f32 %v310, 1.0
      %v312 = vmul.f32 %v311, %v192
      %v313 = vand.u32 2147483647, %v192
      %vm314 = vcmp.lt.f32.partialorder %v313, 0.0004427343
      %v315 = vsel %vm314, %v312, %v309
      %v316 = vadd.f32 %v194, 1.0
      %v317 = vlog2.pop %v316
      %v318 = vmul.f32 %v317, 0.6931472
      %v319 = vmul.f32 -0.5, %v194
      %v320 = vadd.f32 %v319, 1.0
      %v321 = vmul.f32 %v320, %v194
      %v322 = vand.u32 2147483647, %v194
      %vm323 = vcmp.lt.f32.partialorder %v322, 0.0004427343
      %v324 = vsel %vm323, %v321, %v318
      %v325 = vadd.f32 %v196, 1.0
      %v326 = vlog2.pop %v325
      %v327 = vmul.f32 %v326, 0.6931472
      %v328 = vmul.f32 -0.5, %v196
      %v329 = vadd.f32 %v328, 1.0
      %v330 = vmul.f32 %v329, %v196
      %v331 = vand.u32 2147483647, %v196
      %vm332 = vcmp.lt.f32.partialorder %v331, 0.0004427343
      %v333 = vsel %vm332, %v330, %v327
      %v334 = vadd.f32 %v198, 1.0
      %v335 = vlog2.pop %v334
      %v336 = vmul.f32 %v335, 0.6931472
      %v337 = vmul.f32 -0.5, %v198
      %v338 = vadd.f32 %v337, 1.0
      %v339 = vmul.f32 %v338, %v198
      %v340 = vand.u32 2147483647, %v198
      %vm341 = vcmp.lt.f32.partialorder %v340, 0.0004427343
      %v342 = vsel %vm341, %v339, %v336
      %v343 = vadd.f32 %v207, %v216
      %v344 = vadd.f32 %v343, %v225
      %v345 = vadd.f32 %v344, %v234
      %v346 = vadd.f32 %v345, %v243
      %v347 = vadd.f32 %v346, %v252
      %v348 = vadd.f32 %v347, %v261
      %v349 = vadd.f32 %v348, %v270
      %v350 = vadd.f32 %v349, %v279
      %v351 = vadd.f32 %v350, %v288
      %v352 = vadd.f32 %v351, %v297
      %v353 = vadd.f32 %v352, %v306
      %v354 = vadd.f32 %v353, %v315
      %v355 = vadd.f32 %v354, %v324
      %v356 = vadd.f32 %v355, %v333
      %v357 = vadd.f32 %v356, %v342
      %p358 = scmp.eq.s32.totalorder 0, 0
      // Predicated region
      $region14: #{tpu_custom_call.1} parent=12 // pred_check
        %p359 = pneg %p358
      $region15: #{tpu_custom_call.1} parent=12 // pred_check_branch
        %361 = sbr.rel (%p359) target = $region17
      $region16: #{tpu_custom_call.1} parent=12 // pred_region
        %362 = vst [vmem:[#allocation2] sm:$0xff] %v357
      $region17: #{tpu_custom_call.1} parent=12 // pred_fallthru
        _
      %p363 = scmp.gt.s32.totalorder 0, 0
      // Predicated region
      $region18: #{tpu_custom_call.1} parent=12 // pred_check
        %p364 = pneg %p363
      $region19: #{tpu_custom_call.1} parent=12 // pred_check_branch
        %366 = sbr.rel (%p364) target = $region21
      $region20: #{tpu_custom_call.1} parent=12 // pred_region
        %v367 = vld [vmem:[#allocation2] sm:$0xff]
        %v368 = vmul.f32 %v357, 2.0
        %v369 = vadd.f32 %v367, %v368
        %370 = vst [vmem:[#allocation2] sm:$0xff] %v369
      $region21: #{tpu_custom_call.1} parent=12 // pred_fallthru
        _
    $region13: #{tpu_custom_call.1} parent=1 // pred_fallthru
      _
    // Predicated region
    $region22: #{tpu_custom_call.1} parent=1 // pred_check
      _
    $region23: #{tpu_custom_call.1} parent=1 // pred_check_branch
      %372 = sbr.rel (0) target = $region25
    $region24: #{tpu_custom_call.1} parent=1 // pred_region
      %s374 = ssub.s32 128, 128
      %375 = vsyncadd [#allocation3], %s374
      %s377 = sshll.u32 [#allocation2], 4
      %s378 = int_to_ptr.vmem [resolvable:$true] %s377
      %380 = dma.vmem_to_hbm [thread:$0]  %s378, 128, %s2, [#allocation3]
    $region25: #{tpu_custom_call.1} parent=1 // pred_fallthru
      _
    // Predicated region
    $region26: #{tpu_custom_call.1} parent=1 // pred_check
      _
    $region27: #{tpu_custom_call.1} parent=1 // pred_check_branch
      %382 = sbr.rel (0) target = $region29
    $region28: #{tpu_custom_call.1} parent=1 // pred_region
      %383 = dma.done [#allocation3], 128
    $region29: #{tpu_custom_call.1} parent=1 // pred_fallthru
      _
    %384 = vsyncpa [#allocation3], 1

</llo_original>
